<compile_context>
chip_gen: v7x
topology: tpu7x:2x2x1
jax: 0.10.0
libtpu: 0.0.40
codegen_flags: <defaults>
</compile_context>

<pallas_src>
import functools

import jax
import jax.numpy as jnp
from jax.experimental import pallas as pl
from jax.experimental.pallas import tpu as pltpu


def _round_up(x, m):
    return ((x + m - 1) // m) * m


def _vmem_capacity_bytes():
    """Per-core VMEM capacity; conservative fallback if the query is unavailable."""
    try:
        cap = int(pltpu.get_tpu_info().vmem_capacity_bytes)
        if cap > 0:
            return cap
    except Exception:
        pass
    return 64 * 1024 * 1024           # v7x per-TensorCore VMEM (smallest current gen)


def _vmem_footprint_bytes(n_pad, d_pad, tm, feat_itemsize):
    """Rough per-core VMEM footprint estimate used for tile sizing."""
    resident = n_pad * d_pad * feat_itemsize       # contrast matrix (Buffered(1))
    row_blocks = 2 * tm * d_pad * feat_itemsize    # double-buffered anchor row blocks
    labels = 4 * (2 * n_pad + 2 * tm)              # resident col labels + row-label blocks
    panels = 6 * tm * tm * 4                       # live (TM, TN) f32 temporaries
    out = 2 * tm * 4
    return resident + row_blocks + labels + panels + out


def _supcon_kernel(n_valid_ref, feat_row_ref, feat_all_ref, lab_row_ref,
                   lab_col_ref, out_ref, *, inv_temp, loss_scale, unroll_chunks):
    tm = feat_row_ref.shape[0]
    n_chunks, col_chunk = lab_col_ref.shape
    row0 = pl.program_id(0) * tm
    n_valid = n_valid_ref[0]

    # Fold 1/temperature into the small (TM, D) operand (N*D vs N^2 multiplies);
    # the resident contrast matrix already carries the matmul dtype (wrapper cast).
    feat_row = (feat_row_ref[...].astype(jnp.float32) * inv_temp
                ).astype(feat_all_ref.dtype)
    lab_row = lab_row_ref[...]                                        # (TM, 1) i32
    row_ids = jax.lax.broadcasted_iota(jnp.int32, (tm, 1), 0) + row0
    zero = jnp.float32(0.0)

    def chunk_update(c, carry):
        m, z, s_pos, c_pos = carry
        col0 = c * col_chunk
        if not isinstance(c, int):
            col0 = pl.multiple_of(col0, col_chunk)

        # (TM, D) . (TN, D)^T on the MXU as an NT contraction (no transpose copy).
        fa = feat_all_ref[pl.ds(col0, col_chunk), :]
        logits = jax.lax.dot_general(
            feat_row, fa, dimension_numbers=(((1,), (1,)), ((), ())),
            preferred_element_type=jnp.float32)                       # (TM, TN)

        col_ids = jax.lax.broadcasted_iota(jnp.int32, (1, col_chunk), 1) + col0
        valid_col = col_ids < n_valid                                 # (1, TN)
        logits_mask = jnp.logical_and(row_ids != col_ids, valid_col)  # (TM, TN)
        lab_col = lab_col_ref[pl.ds(c, 1), :]                         # (1, TN) i32
        pos_mask = jnp.logical_and(lab_row == lab_col, logits_mask)

        # Online softmax denominator.  Running max over *valid* columns
        # (including self), matching the reference's detached row max.
        chunk_max = jnp.max(jnp.where(valid_col, logits, -jnp.inf),
                            axis=1, keepdims=True)
        m_new = jnp.maximum(m, chunk_max)
        alpha = jnp.exp(m - m_new)
        exp_l = jnp.where(logits_mask, jnp.exp(logits - m_new), zero)
        z = alpha * z + jnp.sum(exp_l, axis=1, keepdims=True)

        # Positive-pair statistics on raw logits (the row max folds out exactly).
        s_pos = s_pos + jnp.sum(jnp.where(pos_mask, logits, zero),
                                axis=1, keepdims=True)
        c_pos = c_pos + jnp.sum(jnp.where(pos_mask, jnp.float32(1.0), zero),
                                axis=1, keepdims=True)
        return m_new, z, s_pos, c_pos

    carry = (jnp.full((tm, 1), -jnp.inf, jnp.float32),
             jnp.zeros((tm, 1), jnp.float32),
             jnp.zeros((tm, 1), jnp.float32),
             jnp.zeros((tm, 1), jnp.float32))
    if n_chunks <= unroll_chunks:
        for c in range(n_chunks):               # static unroll (LLO visibility)
            carry = chunk_update(c, carry)
    else:
        carry = jax.lax.fori_loop(0, n_chunks, chunk_update, carry)
    m, z, s_pos, c_pos = carry

    row_valid = row_ids < n_valid
    # Padded rows are guarded; real anchors with zero positives keep the
    # reference (PyTorch) divide-by-zero / NaN semantics.
    safe_cnt = jnp.where(row_valid, c_pos, jnp.float32(1.0))
    mean_log_prob_pos = s_pos / safe_cnt - m - jnp.log(z)
    out_ref[...] = jnp.where(row_valid, loss_scale * mean_log_prob_pos, zero)


def supcon_loss(features, labels=None, mask=None, *,
                temperature=0.07, contrast_mode='all', base_temperature=0.07,
                block_rows=256, matmul_dtype=jnp.float32, unroll_chunks=8):
    """JAX/Pallas re-implementation of SupConLoss.forward (contrast_mode='all').

    `matmul_dtype=jnp.bfloat16` routes the similarity matmul (and the resident
    contrast matrix's VMEM/HBM bytes) through the bf16 MXU path — recommended
    on v5e when bit-parity is not required; default f32 matches the reference.
    """
    if features.ndim < 3:
        raise ValueError('`features` needs to be [bsz, n_views, ...]')
    if features.ndim > 3:
        features = features.reshape(features.shape[0], features.shape[1], -1)
    bsz, n_views, dim = features.shape

    if labels is not None and mask is not None:
        raise ValueError('Cannot define both `labels` and `mask`')
    if mask is not None:
        # TODO(synk): arbitrary user-supplied [bsz, bsz] masks are not wired into
        # the label-based kernel (labels / default SimCLR eye-mask only).
        raise NotImplementedError('explicit `mask` argument not supported in Pallas path')
    if labels is None:
        labels = jnp.arange(bsz, dtype=jnp.int32)        # SimCLR: mask = eye(bsz)
    else:
        labels = labels.reshape(-1)
        if labels.shape[0] != bsz:
            raise ValueError('Num of labels does not match num of features')
        labels = labels.astype(jnp.int32)

    if contrast_mode != 'all':
        # TODO(synk): contrast_mode='one' (anchor = view 0 only) not wired in.
        raise ValueError('Only contrast_mode="all" implemented')

    n_total = bsz * n_views
    # torch.cat(torch.unbind(features, dim=1), dim=0) -> view-major stacking.
    contrast = jnp.transpose(features, (1, 0, 2)).reshape(n_total, dim)
    contrast = contrast.astype(matmul_dtype)             # cast once, wrapper-side
    labels_n = jnp.tile(labels, n_views)                 # label of row i is labels[i % bsz]

    # ---- (8,128)-friendly padding + per-core-VMEM-aware tile sizing -----------
    feat_itemsize = jnp.dtype(matmul_dtype).itemsize
    d_pad = _round_up(dim, 128)
    block_rows = max(8, _round_up(block_rows, 8))
    vmem_budget = max(32 * 1024 * 1024, int(0.8 * _vmem_capacity_bytes()))

    if n_total <= block_rows:
        tm = _round_up(n_total, 8)
    else:
        tm = block_rows
        while (tm > 64 and
               _vmem_footprint_bytes(_round_up(n_total, tm), d_pad, tm,
                                     feat_itemsize) > vmem_budget):
            tm //= 2
    n_pad = _round_up(n_total, tm)
    n_chunks = n_pad // tm                                 # column chunk TN == TM
    # TODO(synk): if the resident (N_pad, D) contrast matrix alone exceeds the
    # VMEM budget (huge N*D), stream (TN, D) column blocks from HBM instead.

    feat_p = jnp.pad(contrast, ((0, n_pad - n_total), (0, d_pad - dim)))
    lab_p = jnp.pad(labels_n, (0, n_pad - n_total), constant_values=-1)
    lab_row = lab_p.reshape(n_pad, 1)
    lab_col = lab_p.reshape(n_chunks, tm)                  # row c = columns of chunk c
    n_valid_arr = jnp.array([n_total], dtype=jnp.int32)    # scalar-prefetch (SMEM)

    kernel = functools.partial(
        _supcon_kernel,
        inv_temp=1.0 / float(temperature),
        loss_scale=-(float(temperature) / float(base_temperature)),
        unroll_chunks=unroll_chunks)

    cost = pl.CostEstimate(
        flops=2 * n_pad * n_pad * d_pad,
        transcendentals=n_pad * n_pad,                      # exp over logits panels
        bytes_accessed=feat_itemsize * 2 * n_pad * d_pad + 4 * 3 * n_pad)

    per_row = pl.pallas_call(
        kernel,
        out_shape=jax.ShapeDtypeStruct((n_pad, 1), jnp.float32),
        grid_spec=pltpu.PrefetchScalarGridSpec(
            num_scalar_prefetch=1,
            grid=(n_pad // tm,),
            in_specs=[
                # per-step anchor row block (default double-buffering)
                pl.BlockSpec((tm, d_pad), lambda i, nv: (i, 0)),
                # VMEM-resident contrast matrix: fetched once, single buffer
                pl.BlockSpec((n_pad, d_pad), lambda i, nv: (0, 0),
                             pipeline_mode=pl.Buffered(1)),
                # per-step row labels
                pl.BlockSpec((tm, 1), lambda i, nv: (i, 0)),
                # resident column labels, one row per column chunk
                pl.BlockSpec((n_chunks, tm), lambda i, nv: (0, 0),
                             pipeline_mode=pl.Buffered(1)),
            ],
            out_specs=pl.BlockSpec((tm, 1), lambda i, nv: (i, 0)),
        ),
        compiler_params=pltpu.CompilerParams(
            dimension_semantics=("parallel",),
            vmem_limit_bytes=vmem_budget),
        cost_estimate=cost,
    )(n_valid_arr, feat_p, feat_p, lab_row, lab_col)

    return jnp.sum(per_row[:n_total, 0]) / n_total


def _supcon_loss_ref(features, labels, *, temperature=0.07, base_temperature=0.07):
    """Pure-JAX reference mirroring the PyTorch code, for verification."""
    bsz, n_views, dim = features.shape
    labels = labels.reshape(-1, 1)
    mask = (labels == labels.T).astype(jnp.float32)
    contrast_feature = jnp.transpose(features, (1, 0, 2)).reshape(bsz * n_views, dim)
    anchor_feature = contrast_feature
    anchor_count = n_views
    logits = jnp.matmul(anchor_feature, contrast_feature.T) / temperature
    logits = logits - jnp.max(logits, axis=1, keepdims=True)
    n = bsz * anchor_count
    mask = jnp.tile(mask, (anchor_count, n_views))
    logits_mask = 1.0 - jnp.eye(n, dtype=jnp.float32)
    mask = mask * logits_mask
    exp_logits = jnp.exp(logits) * logits_mask
    log_prob = logits - jnp.log(jnp.sum(exp_logits, axis=1, keepdims=True))
    mean_log_prob_pos = jnp.sum(mask * log_prob, axis=1) / jnp.sum(mask, axis=1)
    loss = -(temperature / base_temperature) * mean_log_prob_pos
    return jnp.mean(loss)


if __name__ == "__main__":
    key = jax.random.PRNGKey(0)
    k1, k2 = jax.random.split(key)

    # Small, deliberately unaligned shapes to exercise row/lane padding:
    # N = bsz * n_views = 20 anchors (padded to 24), dim = 96 (padded to 128).
    bsz, n_views, dim = 10, 2, 96
    features = jax.random.normal(k1, (bsz, n_views, dim), dtype=jnp.float32)
    # L2-normalize along feature dim, as is standard for SupCon inputs.
    features = features / jnp.linalg.norm(features, axis=-1, keepdims=True)
    labels = jax.random.randint(k2, (bsz,), 0, 4)

    ref = _supcon_loss_ref(features, labels, temperature=0.07, base_temperature=0.07)

    # Default tiling: single row block, single column chunk.
    loss = supcon_loss(features, labels=labels,
                       temperature=0.07, base_temperature=0.07)
    loss = jax.block_until_ready(loss)
    assert jnp.allclose(loss, ref, atol=1e-3, rtol=1e-3), (loss, ref)

    # Small blocks: 3 row-block grid steps x 3 column chunks exercises the
    # online-softmax chunked accumulation and the row-tiled grid.
    loss_blk = supcon_loss(features, labels=labels, temperature=0.07,
                           base_temperature=0.07, block_rows=8)
    loss_blk = jax.block_until_ready(loss_blk)
    assert jnp.allclose(loss_blk, ref, atol=1e-3, rtol=1e-3), (loss_blk, ref)

    print("KERNEL_OK")
</pallas_src>

<mosaic_0001>
module attributes {stable_mosaic.version = 11 : i64} {
  func.func @_supcon_kernel(%arg0: i32, %arg1: memref<1xi32, #tpu.memory_space<smem>>, %arg2: memref<24x128xf32, #tpu.memory_space<vmem>>, %arg3: memref<24x128xf32, #tpu.memory_space<vmem>>, %arg4: memref<24x1xi32, #tpu.memory_space<vmem>>, %arg5: memref<1x24xi32, #tpu.memory_space<vmem>>, %arg6: memref<24x1xf32, #tpu.memory_space<vmem>>) attributes {dimension_semantics = [#tpu.dimension_semantics<parallel>], iteration_bounds = array<i64: 1>, scalar_prefetch = 1 : i64, scratch_operands = 0 : i64, tpu.core_type = #tpu.core_type<tc>, window_params = [{transform_indices = @transform_0, window_bounds = array<i64: 24, 128>}, {pipeline_mode = #tpu.pipeline_mode<synchronous>, transform_indices = @transform_1, window_bounds = array<i64: 24, 128>}, {transform_indices = @transform_2, window_bounds = array<i64: 24, 1>}, {pipeline_mode = #tpu.pipeline_mode<synchronous>, transform_indices = @transform_3, window_bounds = array<i64: 1, 24>}, {transform_indices = @transform_4, window_bounds = array<i64: 24, 1>}]} {
    %c24_i32 = arith.constant 24 : i32
    %0 = arith.muli %arg0, %c24_i32 : i32
    %c0 = arith.constant 0 : index
    %1 = memref.load %arg1[%c0] : memref<1xi32, #tpu.memory_space<smem>>
    %c0_0 = arith.constant 0 : index
    %c0_1 = arith.constant 0 : index
    %2 = vector.load %arg2[%c0_0, %c0_1] : memref<24x128xf32, #tpu.memory_space<vmem>>, vector<24x128xf32>
    %cst = arith.constant 14.2857141 : f32
    %3 = vector.broadcast %cst : f32 to vector<24x128xf32>
    %4 = arith.mulf %2, %3 : vector<24x128xf32>
    %c0_2 = arith.constant 0 : index
    %c0_3 = arith.constant 0 : index
    %5 = vector.load %arg4[%c0_2, %c0_3] : memref<24x1xi32, #tpu.memory_space<vmem>>, vector<24x1xi32>
    %6 = tpu.iota {dimensions = array<i32: 0>} : vector<24x1xi32>
    %7 = vector.broadcast %0 : i32 to vector<24x1xi32>
    %8 = arith.addi %6, %7 : vector<24x1xi32>
    %cst_4 = arith.constant 0xFF800000 : f32
    %9 = vector.broadcast %cst_4 : f32 to vector<24x1xf32>
    %cst_5 = arith.constant 0.000000e+00 : f32
    %10 = vector.broadcast %cst_5 : f32 to vector<24x1xf32>
    %cst_6 = arith.constant 0.000000e+00 : f32
    %11 = vector.broadcast %cst_6 : f32 to vector<24x1xf32>
    %cst_7 = arith.constant 0.000000e+00 : f32
    %12 = vector.broadcast %cst_7 : f32 to vector<24x1xf32>
    %c0_8 = arith.constant 0 : index
    %c0_9 = arith.constant 0 : index
    %13 = vector.load %arg3[%c0_8, %c0_9] : memref<24x128xf32, #tpu.memory_space<vmem>>, vector<24x128xf32>
    %cst_10 = arith.constant dense<0.000000e+00> : vector<24x24xf32>
    %14 = tpu.matmul %4, %13, %cst_10 {dimension_numbers = #tpu.dot_dimension_numbers<[1], [1], [0], [0], [0, 0, 1, 0], [], []>} : vector<24x128xf32>, vector<24x128xf32>, vector<24x24xf32> -> vector<24x24xf32>
    %15 = tpu.iota {dimensions = array<i32: 1>} : vector<1x24xi32>
    %c0_i32 = arith.constant 0 : i32
    %16 = vector.broadcast %c0_i32 : i32 to vector<1x24xi32>
    %17 = arith.addi %15, %16 : vector<1x24xi32>
    %18 = vector.broadcast %1 : i32 to vector<1x24xi32>
    %19 = arith.cmpi slt, %17, %18 : vector<1x24xi32>
    %20 = vector.broadcast %8 : vector<24x1xi32> to vector<24x24xi32>
    %21 = vector.broadcast %17 : vector<1x24xi32> to vector<24x24xi32>
    %22 = arith.cmpi ne, %20, %21 : vector<24x24xi32>
    %23 = vector.broadcast %19 : vector<1x24xi1> to vector<24x24xi1>
    %24 = arith.andi %22, %23 : vector<24x24xi1>
    %c0_11 = arith.constant 0 : index
    %c0_12 = arith.constant 0 : index
    %25 = vector.load %arg5[%c0_11, %c0_12] : memref<1x24xi32, #tpu.memory_space<vmem>>, vector<1x24xi32>
    %26 = vector.broadcast %5 : vector<24x1xi32> to vector<24x24xi32>
    %27 = vector.broadcast %25 : vector<1x24xi32> to vector<24x24xi32>
    %28 = arith.cmpi eq, %26, %27 : vector<24x24xi32>
    %29 = arith.andi %28, %24 : vector<24x24xi1>
    %cst_13 = arith.constant 0xFF800000 : f32
    %30 = vector.shape_cast %19 : vector<1x24xi1> to vector<1x24xi1>
    %31 = vector.broadcast %30 : vector<1x24xi1> to vector<24x24xi1>
    %32 = vector.broadcast %cst_13 : f32 to vector<24x24xf32>
    %33 = arith.select %31, %14, %32 : vector<24x24xi1>, vector<24x24xf32>
    %cst_14 = arith.constant dense<0xFF800000> : vector<24xf32>
    %34 = vector.multi_reduction <maximumf>, %33, %cst_14 [1] : vector<24x24xf32> to vector<24xf32>
    %35 = vector.shape_cast %34 : vector<24xf32> to vector<24x1xf32>
    %36 = arith.maximumf %9, %35 : vector<24x1xf32>
    %37 = arith.subf %9, %36 : vector<24x1xf32>
    %38 = math.exp %37 : vector<24x1xf32>
    %39 = vector.broadcast %36 : vector<24x1xf32> to vector<24x24xf32>
    %40 = arith.subf %14, %39 : vector<24x24xf32>
    %41 = math.exp %40 : vector<24x24xf32>
    %cst_15 = arith.constant 0.000000e+00 : f32
    %42 = vector.broadcast %cst_15 : f32 to vector<24x24xf32>
    %43 = arith.select %24, %41, %42 : vector<24x24xi1>, vector<24x24xf32>
    %44 = arith.mulf %38, %10 : vector<24x1xf32>
    %cst_16 = arith.constant dense<0.000000e+00> : vector<24xf32>
    %45 = vector.multi_reduction <add>, %43, %cst_16 [1] : vector<24x24xf32> to vector<24xf32>
    %46 = vector.shape_cast %45 : vector<24xf32> to vector<24x1xf32>
    %47 = arith.addf %44, %46 : vector<24x1xf32>
    %cst_17 = arith.constant 0.000000e+00 : f32
    %48 = vector.broadcast %cst_17 : f32 to vector<24x24xf32>
    %49 = arith.select %29, %14, %48 : vector<24x24xi1>, vector<24x24xf32>
    %cst_18 = arith.constant dense<0.000000e+00> : vector<24xf32>
    %50 = vector.multi_reduction <add>, %49, %cst_18 [1] : vector<24x24xf32> to vector<24xf32>
    %51 = vector.shape_cast %50 : vector<24xf32> to vector<24x1xf32>
    %52 = arith.addf %11, %51 : vector<24x1xf32>
    %cst_19 = arith.constant 1.000000e+00 : f32
    %cst_20 = arith.constant 0.000000e+00 : f32
    %53 = vector.broadcast %cst_19 : f32 to vector<24x24xf32>
    %54 = vector.broadcast %cst_20 : f32 to vector<24x24xf32>
    %55 = arith.select %29, %53, %54 : vector<24x24xi1>, vector<24x24xf32>
    %cst_21 = arith.constant dense<0.000000e+00> : vector<24xf32>
    %56 = vector.multi_reduction <add>, %55, %cst_21 [1] : vector<24x24xf32> to vector<24xf32>
    %57 = vector.shape_cast %56 : vector<24xf32> to vector<24x1xf32>
    %58 = arith.addf %12, %57 : vector<24x1xf32>
    %59 = vector.broadcast %1 : i32 to vector<24x1xi32>
    %60 = arith.cmpi slt, %8, %59 : vector<24x1xi32>
    %cst_22 = arith.constant 1.000000e+00 : f32
    %61 = vector.broadcast %cst_22 : f32 to vector<24x1xf32>
    %62 = arith.select %60, %58, %61 : vector<24x1xi1>, vector<24x1xf32>
    %63 = arith.divf %52, %62 : vector<24x1xf32>
    %64 = arith.subf %63, %36 : vector<24x1xf32>
    %65 = math.log %47 : vector<24x1xf32>
    %66 = arith.subf %64, %65 : vector<24x1xf32>
    %cst_23 = arith.constant -1.000000e+00 : f32
    %67 = vector.broadcast %cst_23 : f32 to vector<24x1xf32>
    %68 = arith.mulf %67, %66 : vector<24x1xf32>
    %cst_24 = arith.constant 0.000000e+00 : f32
    %69 = vector.broadcast %cst_24 : f32 to vector<24x1xf32>
    %70 = arith.select %60, %68, %69 : vector<24x1xi1>, vector<24x1xf32>
    %c0_25 = arith.constant 0 : index
    %c0_26 = arith.constant 0 : index
    %71 = vector.load %arg6[%c0_25, %c0_26] : memref<24x1xf32, #tpu.memory_space<vmem>>, vector<24x1xf32>
    tpu.vector_store %arg6[%c0_25, %c0_26], %70 {strides = array<i32>} : memref<24x1xf32, #tpu.memory_space<vmem>>, vector<24x1xf32>,
    return
  }
  func.func @transform_0(%arg0: i32, %arg1: memref<1xi32, #tpu.memory_space<smem>>) -> (i32, i32) {
    %c0_i32 = arith.constant 0 : i32
    %c0_i32_0 = arith.constant 0 : i32
    return %arg0, %c0_i32 : i32, i32
  }
  func.func @transform_1(%arg0: i32, %arg1: memref<1xi32, #tpu.memory_space<smem>>) -> (i32, i32) {
    %c0_i32 = arith.constant 0 : i32
    %c0_i32_0 = arith.constant 0 : i32
    %c0_i32_1 = arith.constant 0 : i32
    return %c0_i32, %c0_i32_0 : i32, i32
  }
  func.func @transform_2(%arg0: i32, %arg1: memref<1xi32, #tpu.memory_space<smem>>) -> (i32, i32) {
    %c0_i32 = arith.constant 0 : i32
    %c0_i32_0 = arith.constant 0 : i32
    return %arg0, %c0_i32 : i32, i32
  }
  func.func @transform_3(%arg0: i32, %arg1: memref<1xi32, #tpu.memory_space<smem>>) -> (i32, i32) {
    %c0_i32 = arith.constant 0 : i32
    %c0_i32_0 = arith.constant 0 : i32
    %c0_i32_1 = arith.constant 0 : i32
    return %c0_i32, %c0_i32_0 : i32, i32
  }
  func.func @transform_4(%arg0: i32, %arg1: memref<1xi32, #tpu.memory_space<smem>>) -> (i32, i32) {
    %c0_i32 = arith.constant 0 : i32
    %c0_i32_0 = arith.constant 0 : i32
    return %arg0, %c0_i32 : i32, i32
  }
}

</mosaic_0001>

<llo_original>
// kernel: tpu_custom_call.1
$region0: #{tpu_custom_call.1}
  #allocation0 [shape = 'u32[]', space=smem, size = 0x4, offset = 0x4, fixed_abs, tag = 'smem constant byte address 0x4 - core index']
  #allocation1 [shape = 'u32[144,128]{1,0:T(1,128)}', space=vmem, size = 0x12000, scoped, tag = 'internal scratch']
  #allocation2 [shape = 's32[1]{0}', space=sflag, size = 0x4, scoped, tag = 'scoped memory for tpu_custom_call.1']
  #allocation3 [shape = 's32[1]{0:T(128)S(6)}', space=smem, size = 0x200, scoped, tag = 'prefetched SMEM operand 0']
  %s0 = inlined_call_operand.<no memory space> [shape: s32[1], index: 0, kind: input, shape index: {}]
  %s1 = inlined_call_operand.vmem [shape: f32[24,128], index: 1, kind: input, shape index: {}]
  %s2 = inlined_call_operand.hbm [shape: f32[24,128], index: 2, kind: input, shape index: {}]
  %s3 = inlined_call_operand.vmem [shape: s32[24,1], index: 3, kind: input, shape index: {}]
  %s4 = inlined_call_operand.vmem [shape: s32[1,24], index: 4, kind: input, shape index: {}]
  %s5 = inlined_call_operand.vmem [shape: f32[24,1], index: 5, kind: output, shape index: {}]
  %s6 = sld [smem:[#allocation0]]
  $region30: #{tpu_custom_call.1} parent=0
    _
  %s8 = ssub.s32 1, %s6
  %s9 = scalar_select 0, %s8, %s6
  %10 = sst [smem:[#allocation3]] %s0
  $region1: #{tpu_custom_call.1} parent=0
    #allocation4 [shape = 'u8[12288]{0}', space=vmem, size = 0x3000, scoped, tag = 'input window, operand 2, single buffered']
    #allocation5 [shape = 's32[1]{0}', space=sflag, size = 0x4, scoped, tag = 'scoped memory for tpu_custom_call.1']
    %11 = vsyncpa [#allocation5], 0
    // Predicated region
    $region2: #{tpu_custom_call.1} parent=1 // pred_check
      _
    $region3: #{tpu_custom_call.1} parent=1 // pred_check_branch
      %13 = sbr.rel (0) target = $region5
    $region4: #{tpu_custom_call.1} parent=1 // pred_region
      _
    $region5: #{tpu_custom_call.1} parent=1 // pred_fallthru
      _
    // Predicated region
    $region6: #{tpu_custom_call.1} parent=1 // pred_check
      _
    $region7: #{tpu_custom_call.1} parent=1 // pred_check_branch
      %15 = sbr.rel (0) target = $region9
    $region8: #{tpu_custom_call.1} parent=1 // pred_region
      %s17 = ssub.s32 384, 384
      %18 = vsyncadd [#allocation5], %s17
      %s19 = sshll.u32 [#allocation4], 4
      %s20 = int_to_ptr.vmem [resolvable:$true] %s19
      %25 = dma.hbm_to_vmem [thread:$0]  %s2, 384, %s20, [#allocation5], 128, 128, 8
    $region9: #{tpu_custom_call.1} parent=1 // pred_fallthru
      _
    // Predicated region
    $region10: #{tpu_custom_call.1} parent=1 // pred_check
      _
    $region11: #{tpu_custom_call.1} parent=1 // pred_check_branch
      %27 = sbr.rel (0) target = $region13
    $region12: #{tpu_custom_call.1} parent=1 // pred_region
      _
    $region13: #{tpu_custom_call.1} parent=1 // pred_fallthru
      _
    // Predicated region
    $region14: #{tpu_custom_call.1} parent=1 // pred_check
      _
    $region15: #{tpu_custom_call.1} parent=1 // pred_check_branch
      %29 = sbr.rel (0) target = $region17
    $region16: #{tpu_custom_call.1} parent=1 // pred_region
      _
    $region17: #{tpu_custom_call.1} parent=1 // pred_fallthru
      _
    // Predicated region
    $region18: #{tpu_custom_call.1} parent=1 // pred_check
      _
    $region19: #{tpu_custom_call.1} parent=1 // pred_check_branch
      %31 = sbr.rel (0) target = $region21
    $region20: #{tpu_custom_call.1} parent=1 // pred_region
      %32 = dma.done [#allocation5], 384
    $region21: #{tpu_custom_call.1} parent=1 // pred_fallthru
      _
    %s33 = smul.u32 0, 24
    %s34 = sld [smem:[#allocation3]]
    %v35 = vld [vmem:[%s1] sm:$0xff]
    %v36 = vld [vmem:[%s1 + $0x8] sm:$0xff]
    %v37 = vld [vmem:[%s1 + $0x10] sm:$0xff]
    %v38 = vmul.f32 %v35, 14.285714
    %v39 = vmul.f32 %v36, 14.285714
    %v40 = vmul.f32 %v37, 14.285714
    %v41 = vld [vmem:[%s3] sm:$0xff]
    %v42 = vld [vmem:[%s3 + $0x8] sm:$0xff]
    %v43 = vld [vmem:[%s3 + $0x10] sm:$0xff]
    %v44 = vlaneseq
    %v45 = vshrl.u32 %v44, 7
    %v46 = vadd.s32 %v45, 8
    %v47 = vadd.s32 %v45, 16
    %v48 = vstv %s33
    %v49 = vadd.s32 %v45, %v48
    %v50 = vadd.s32 %v46, %v48
    %v51 = vadd.s32 %v47, %v48
    %v52 = vld [vmem:[#allocation4] sm:$0xff]
    %v53 = vld [vmem:[#allocation4 + $0x8] sm:$0xff]
    %v54 = vld [vmem:[#allocation4 + $0x10] sm:$0xff]
    %55 = vmatprep.subr.mxu0 0.0
    %56 = vmatpush1.xpose.msra.mxu0 %v52
    %57 = vmatprep.subr.mxu0 0.0
    %58 = vmatpush1.xpose.msra.mxu0 %v53
    %59 = vmatprep.subr.mxu0 0.0
    %60 = vmatpush1.xpose.msra.mxu0 %v54
    %61 = vmatprep.subr.mxu0 0.0
    %62 = vmatpush1.xpose.msra.mxu0 0.0
    %63 = vmatprep.subr.mxu0 0.0
    %64 = vmatpush1.xpose.msra.mxu0 0.0
    %65 = vmatprep.subr.mxu0 0.0
    %66 = vmatpush1.xpose.msra.mxu0 0.0
    %67 = vmatprep.subr.mxu0 0.0
    %68 = vmatpush1.xpose.msra.mxu0 0.0
    %69 = vmatprep.subr.mxu0 0.0
    %70 = vmatpush1.xpose.msra.mxu0 0.0
    %71 = vmatprep.subr.mxu0 0.0
    %72 = vmatpush1.xpose.msra.mxu0 0.0
    %73 = vmatprep.subr.mxu0 0.0
    %74 = vmatpush1.xpose.msra.mxu0 0.0
    %75 = vmatprep.subr.mxu0 0.0
    %76 = vmatpush1.xpose.msra.mxu0 0.0
    %77 = vmatprep.subr.mxu0 0.0
    %78 = vmatpush1.xpose.msra.mxu0 0.0
    %79 = vmatprep.subr.mxu0 0.0
    %80 = vmatpush1.xpose.msra.mxu0 0.0
    %81 = vmatprep.subr.mxu0 0.0
    %82 = vmatpush1.xpose.msra.mxu0 0.0
    %83 = vmatprep.subr.mxu0 0.0
    %84 = vmatpush1.xpose.msra.mxu0 0.0
    %85 = vmatprep.subr.mxu0 0.0
    %86 = vmatpush1.xpose.msra.mxu0 0.0
    %87 = vmatprep.subr.mxu0 0.0
    %88 = vmatpush1.xpose.msra.mxu0 0.0
    %89 = vmatprep.subr.mxu0 0.0
    %90 = vmatpush1.xpose.msra.mxu0 0.0
    %91 = vmatprep.subr.mxu0 0.0
    %92 = vmatpush1.xpose.msra.mxu0 0.0
    %93 = vmatprep.subr.mxu0 0.0
    %94 = vmatpush1.xpose.msra.mxu0 0.0
    %95 = vmatprep.subr.mxu0 0.0
    %96 = vmatpush1.xpose.msra.mxu0 0.0
    %97 = vmatprep.subr.mxu0 0.0
    %98 = vmatpush1.xpose.msra.mxu0 0.0
    %99 = vmatprep.subr.mxu0 0.0
    %100 = vmatpush1.xpose.msra.mxu0 0.0
    %101 = vmatprep.subr.mxu0 0.0
    %102 = vmatpush1.xpose.msra.mxu0 0.0
    %103 = vmatprep.subr.mxu0 0.0
    %104 = vmatpush1.xpose.msra.mxu0 0.0
    %105 = vmatprep.subr.mxu0 0.0
    %106 = vmatpush1.xpose.msra.mxu0 0.0
    %107 = vmatprep.subr.mxu0 0.0
    %108 = vmatpush1.xpose.msra.mxu0 0.0
    %109 = vmatprep.subr.mxu0 0.0
    %110 = vmatpush1.xpose.msra.mxu0 0.0
    %111 = vmatprep.subr.mxu0 0.0
    %112 = vmatpush1.xpose.msra.mxu0 0.0
    %113 = vmatprep.subr.mxu0 0.0
    %114 = vmatpush1.xpose.msra.mxu0 0.0
    %115 = vmatprep.subr.mxu0 0.0
    %116 = vmatpush1.xpose.msra.mxu0 0.0
    %117 = vmatprep.subr.mxu0 0.0
    %118 = vmatpush1.xpose.msra.mxu0 0.0
    %119 = vmatprep.mubr.f32.mxu0 0.0
    %120 = vmatmul.mubr.f32.gmra.mrb[0].mxu0 %v38
    %v121 = vpop.f32.mrb[0].mxu0
    %v122 = vadd.f32 0.0, %v121
    %v123 = vpop.f32.mrb[0].mxu0
    %124 = vmatprep.mubr.f32.mxu0 0.0
    %125 = vmatmul.mubr.f32.gmra.mrb[0].mxu0 %v39
    %v126 = vpop.f32.mrb[0].mxu0
    %v127 = vadd.f32 0.0, %v126
    %v128 = vpop.f32.mrb[0].mxu0
    %129 = vmatprep.mubr.f32.mxu0 0.0
    %130 = vmatmul.mubr.f32.gmra.mrb[0].mxu0 %v40
    %v131 = vpop.f32.mrb[0].mxu0
    %v132 = vadd.f32 0.0, %v131
    %v133 = vpop.f32.mrb[0].mxu0
    %134 = vdwg.mxu0
    %v135 = vlaneseq
    %v136 = vand.u32 %v135, 127
    %v137 = vstv %s34
    %vm138 = vcmp.lt.s32.totalorder %v136, %v137
    %vm139 = vcmp.ne.s32.totalorder %v49, %v136
    %vm140 = vcmp.ne.s32.totalorder %v50, %v136
    %vm141 = vcmp.ne.s32.totalorder %v51, %v136
    %v142 = vsel %vm138, 1, 0
    %vm143 = vcmp.eq.s32.totalorder %v142, 1
    %vm144 = vmand %vm139, %vm143
    %vm145 = vmand %vm140, %vm143
    %vm146 = vmand %vm141, %vm143
    %v147 = vld [vmem:[%s4] sm:$0x1]
    %148 = vset.pattern.permute.xlu0 0
    %149 = vperm.xlu0 %148, %v41
    %v150 = vpop.permute.xlu0 %149
    %151 = vset.pattern.permute.xlu0 0
    %152 = vperm.xlu0 %151, %v42
    %v153 = vpop.permute.xlu0 %152
    %154 = vset.pattern.permute.xlu0 0
    %155 = vperm.xlu0 %154, %v43
    %v156 = vpop.permute.xlu0 %155
    %v157 = vlaneseq
    %v158 = vshrl.u32 %v157, 7
    %v159 = vsub.s32 0, %v158
    %v160 = vrot.slane %v147, %v159
    %vm161 = vcmp.eq.s32.totalorder %v150, %v160
    %vm162 = vcmp.eq.s32.totalorder %v153, %v160
    %vm163 = vcmp.eq.s32.totalorder %v156, %v160
    %vm164 = vmand %vm161, %vm144
    %vm165 = vmand %vm162, %vm145
    %vm166 = vmand %vm163, %vm146
    %v167 = vsel %vm143, %v122, -inf
    %v168 = vsel %vm143, %v127, -inf
    %v169 = vsel %vm143, %v132, -inf
    %vm170 = vcmask 195584
    %v171 = vsel %vm170, %v167, -inf
    %172 = vmax.xlane.f32.xlu0 %v171
    %v173 = vpop.xlane.xlu0 %172
    %v174 = vsel %vm170, %v168, -inf
    %175 = vmax.xlane.f32.xlu0 %v174
    %v176 = vpop.xlane.xlu0 %175
    %v177 = vsel %vm170, %v169, -inf
    %178 = vmax.xlane.f32.xlu0 %v177
    %v179 = vpop.xlane.xlu0 %178
    %v180 = vsub.f32 -inf, %v173
    %v181 = vsub.f32 -inf, %v176
    %v182 = vsub.f32 -inf, %v179
    %v183 = vmul.f32 %v180, 1.442695
    %v184 = vpow.pop %v183
    %v185 = vmul.f32 %v181, 1.442695
    %v186 = vpow.pop %v185
    %v187 = vmul.f32 %v182, 1.442695
    %v188 = vpow.pop %v187
    %v189 = vsub.f32 %v122, %v173
    %v190 = vsub.f32 %v127, %v176
    %v191 = vsub.f32 %v132, %v179
    %v192 = vmul.f32 %v189, 1.442695
    %v193 = vpow.pop %v192
    %v194 = vmul.f32 %v190, 1.442695
    %v195 = vpow.pop %v194
    %v196 = vmul.f32 %v191, 1.442695
    %v197 = vpow.pop %v196
    %v198 = vsel %vm144, %v193, 0.0
    %v199 = vsel %vm145, %v195, 0.0
    %v200 = vsel %vm146, %v197, 0.0
    %v201 = vmul.f32 %v184, 0.0
    %v202 = vmul.f32 %v186, 0.0
    %v203 = vmul.f32 %v188, 0.0
    %v204 = vsel %vm170, %v198, 0.0
    %205 = vadd.xlane.f32.xlu0 %v204
    %v206 = vpop.xlane.xlu0 %205
    %v207 = vsel %vm170, %v199, 0.0
    %208 = vadd.xlane.f32.xlu0 %v207
    %v209 = vpop.xlane.xlu0 %208
    %v210 = vsel %vm170, %v200, 0.0
    %211 = vadd.xlane.f32.xlu0 %v210
    %v212 = vpop.xlane.xlu0 %211
    %v213 = vadd.f32 %v201, %v206
    %v214 = vadd.f32 %v202, %v209
    %v215 = vadd.f32 %v203, %v212
    %v216 = vsel %vm164, %v122, 0.0
    %v217 = vsel %vm165, %v127, 0.0
    %v218 = vsel %vm166, %v132, 0.0
    %v219 = vsel %vm170, %v216, 0.0
    %220 = vadd.xlane.f32.xlu0 %v219
    %v221 = vpop.xlane.xlu0 %220
    %v222 = vsel %vm170, %v217, 0.0
    %223 = vadd.xlane.f32.xlu0 %v222
    %v224 = vpop.xlane.xlu0 %223
    %v225 = vsel %vm170, %v218, 0.0
    %226 = vadd.xlane.f32.xlu0 %v225
    %v227 = vpop.xlane.xlu0 %226
    %v228 = vadd.f32 %v221, 0.0
    %v229 = vadd.f32 %v224, 0.0
    %v230 = vadd.f32 %v227, 0.0
    %v231 = vsel %vm164, 1.0, 0.0
    %v232 = vsel %vm165, 1.0, 0.0
    %v233 = vsel %vm166, 1.0, 0.0
    %v234 = vsel %vm170, %v231, 0.0
    %235 = vadd.xlane.f32.xlu0 %v234
    %v236 = vpop.xlane.xlu0 %235
    %v237 = vsel %vm170, %v232, 0.0
    %238 = vadd.xlane.f32.xlu0 %v237
    %v239 = vpop.xlane.xlu0 %238
    %v240 = vsel %vm170, %v233, 0.0
    %241 = vadd.xlane.f32.xlu0 %v240
    %v242 = vpop.xlane.xlu0 %241
    %v243 = vadd.f32 %v236, 0.0
    %v244 = vadd.f32 %v239, 0.0
    %v245 = vadd.f32 %v242, 0.0
    %vm246 = vcmp.lt.s32.totalorder %v49, %v137
    %vm247 = vcmp.lt.s32.totalorder %v50, %v137
    %vm248 = vcmp.lt.s32.totalorder %v51, %v137
    %v249 = vsel %vm246, %v243, 1.0
    %v250 = vsel %vm247, %v244, 1.0
    %v251 = vsel %vm248, %v245, 1.0
    %v252 = vrcp.pop %v249
    %v253 = vmul.f32 %v228, %v252
    %v254 = vrcp.pop %v250
    %v255 = vmul.f32 %v229, %v254
    %v256 = vrcp.pop %v251
    %v257 = vmul.f32 %v230, %v256
    %v258 = vsub.f32 %v253, %v173
    %v259 = vsub.f32 %v255, %v176
    %v260 = vsub.f32 %v257, %v179
    %v261 = vlog2.pop %v213
    %v262 = vmul.f32 %v261, 0.6931472
    %v263 = vlog2.pop %v214
    %v264 = vmul.f32 %v263, 0.6931472
    %v265 = vlog2.pop %v215
    %v266 = vmul.f32 %v265, 0.6931472
    %v267 = vsub.f32 %v258, %v262
    %v268 = vsub.f32 %v259, %v264
    %v269 = vsub.f32 %v260, %v266
    %v270 = vmul.f32 %v267, -1.0
    %v271 = vmul.f32 %v268, -1.0
    %v272 = vmul.f32 %v269, -1.0
    %v273 = vsel %vm246, %v270, 0.0
    %v274 = vsel %vm247, %v271, 0.0
    %v275 = vsel %vm248, %v272, 0.0
    %vm276 = vcmask 7168
    %277 = vst.msk [vmem:[%s5] sm:$0xff] %vm276, %v273
    %278 = vst.msk [vmem:[%s5 + $0x8] sm:$0xff] %vm276, %v274
    %279 = vst.msk [vmem:[%s5 + $0x10] sm:$0xff] %vm276, %v275
    // Predicated region
    $region22: #{tpu_custom_call.1} parent=1 // pred_check
      _
    $region23: #{tpu_custom_call.1} parent=1 // pred_check_branch
      %281 = sbr.rel (0) target = $region25
    $region24: #{tpu_custom_call.1} parent=1 // pred_region
      _
    $region25: #{tpu_custom_call.1} parent=1 // pred_fallthru
      _
    // Predicated region
    $region26: #{tpu_custom_call.1} parent=1 // pred_check
      _
    $region27: #{tpu_custom_call.1} parent=1 // pred_check_branch
      %283 = sbr.rel (0) target = $region29
    $region28: #{tpu_custom_call.1} parent=1 // pred_region
      _
    $region29: #{tpu_custom_call.1} parent=1 // pred_fallthru
      _
    %284 = vsyncpa [#allocation5], 1

</llo_original>
